<compile_context>
chip_gen: v6e
topology: v6e:2x2x1
jax: 0.10.0
libtpu: 0.0.40
codegen_flags: <defaults>
</compile_context>

<pallas_src>
import numpy as np
import jax
import jax.numpy as jnp
from jax import lax
from jax.experimental import pallas as pl
from jax.experimental.pallas import tpu as pltpu


def _round_up(a: int, m: int) -> int:
    return (a + m - 1) // m * m


def _distance_kernel(pairs_ref, iota_ref, xc_ref, out_ref):
    # pairs_ref : [2, TP]            int32; row 0 = i indices, row 1 = j indices
    # iota_ref  : [n_atom, TP]       int32; iota_ref[n, p] = n (tile-invariant)
    # xc_ref    : [3*B_pad, n_atom]  f32; rows [c*B_pad : c*B_pad+B] = component c
    # out_ref   : [B_pad, TP]
    b_pad = out_ref.shape[0]

    i_idx = pairs_ref[0:1, :]                       # [1, TP]
    j_idx = pairs_ref[1:2, :]                       # [1, TP]
    atom_iota = iota_ref[...]                       # [n_atom, TP]

    # Difference selector: +1 at row j_p, -1 at row i_p, 0 elsewhere.
    # Single where-chain: 2 compares + 2 selects, no extra converts.
    sel = jnp.where(atom_iota == j_idx, jnp.float32(1.0),
                    jnp.where(atom_iota == i_idx, jnp.float32(-1.0),
                              jnp.float32(0.0)))    # [n_atom, TP] f32

    # One fused MXU contraction for all three components and all batches:
    #   d[c*B_pad + b, p] = x_c[b, j_p] - x_c[b, i_p]
    d = jnp.dot(xc_ref[...], sel,
                preferred_element_type=jnp.float32,
                precision=lax.Precision.HIGHEST)    # [3*B_pad, TP]

    d2 = d * d
    # Sublane-aligned row-group reduction (offsets 0, B_pad, 2*B_pad are
    # multiples of 8 by construction).
    dist2 = (d2[0:b_pad, :]
             + d2[b_pad:2 * b_pad, :]
             + d2[2 * b_pad:3 * b_pad, :])          # [B_pad, TP]

    out_ref[...] = jnp.sqrt(dist2).astype(out_ref.dtype)


def distance_layer(x, *, pair_tile=1024):
    """x: [n_batch, n_atom, 3] -> [n_batch, n_atom*(n_atom-1)//2]"""
    assert pair_tile % 128 == 0
    n_batch, n_atom, _ = x.shape

    # Same ordering as torch.triu_indices(n_atom, n_atom, 1): row-major, i < j.
    iu, ju = np.triu_indices(n_atom, k=1)
    n_pairs = int(iu.shape[0])
    if n_pairs == 0:
        return jnp.zeros((n_batch, 0), dtype=x.dtype)

    # Batch padded to a sublane multiple -> aligned row groups & dense stores.
    b_pad = _round_up(max(n_batch, 1), 8)

    # --- pair-axis tile selection ------------------------------------------
    tp = min(pair_tile, _round_up(n_pairs, 128))
    # Cap TP so selector/iota intermediates (~4 live [n_atom, TP] f32/i32
    # planes) stay well under VMEM — matters most on v7x (64 MiB, 32 scoped).
    vmem_budget = 8 * 1024 * 1024
    max_tp = max(128, (vmem_budget // (4 * 4 * max(n_atom, 1))) // 128 * 128)
    tp = max(128, min(tp, max_tp))
    # Prefer >= 2 grid tiles so the "parallel" pair axis can shard across both
    # v7x TensorCores (no-op on single-TC v5e/v6e).
    if _round_up(n_pairs, tp) // tp < 2 and tp >= 256:
        tp = _round_up(tp // 2, 128)
    p_pad = _round_up(n_pairs, tp)
    grid = (p_pad // tp,)

    # --- host-side constant inputs -----------------------------------------
    pairs = np.zeros((2, p_pad), np.int32)          # packed (i; j), zero-padded
    pairs[0, :n_pairs] = iu
    pairs[1, :n_pairs] = ju

    # Tile-invariant atom-index plane (resident in VMEM across the grid).
    atom_iota = np.ascontiguousarray(
        np.broadcast_to(np.arange(n_atom, dtype=np.int32)[:, None],
                        (n_atom, tp)))

    # Component-major stacked coordinate planes, batch padded with zeros:
    # rows [c*b_pad : c*b_pad + n_batch] hold component c.
    xf = x.astype(jnp.float32)
    xf = jnp.pad(xf, ((0, b_pad - n_batch), (0, 0), (0, 0)))      # [BP, A, 3]
    xc = jnp.transpose(xf, (2, 0, 1)).reshape(3 * b_pad, n_atom)  # [3*BP, A]

    out_padded = pl.pallas_call(
        _distance_kernel,
        out_shape=jax.ShapeDtypeStruct((b_pad, p_pad), x.dtype),
        grid=grid,
        in_specs=[
            pl.BlockSpec((2, tp), lambda p: (0, p)),              # pair indices
            pl.BlockSpec((n_atom, tp), lambda p: (0, 0)),         # atom iota (resident)
            pl.BlockSpec((3 * b_pad, n_atom), lambda p: (0, 0)),  # coords (resident)
        ],
        out_specs=pl.BlockSpec((b_pad, tp), lambda p: (0, p)),
        compiler_params=pltpu.CompilerParams(
            dimension_semantics=("parallel",)),
    )(jnp.asarray(pairs), jnp.asarray(atom_iota), xc)

    return out_padded[:n_batch, :n_pairs]


def _reference(x):
    n_atom = x.shape[1]
    iu, ju = jnp.triu_indices(n_atom, k=1)
    diff = x[:, ju, :] - x[:, iu, :]
    return jnp.linalg.norm(diff.astype(jnp.float32), ord=2, axis=-1)


if __name__ == "__main__":
    key = jax.random.PRNGKey(0)

    # Test 1: small shape matching the module docstring (single tile path).
    n_batch, n_atom = 2, 8                           # -> n_pairs = 28
    x = jax.random.normal(key, (n_batch, n_atom, 3), dtype=jnp.float32)
    out = jax.block_until_ready(distance_layer(x))
    ref = _reference(x)
    assert out.shape == (n_batch, n_atom * (n_atom - 1) // 2)
    assert jnp.allclose(out, ref, atol=1e-4, rtol=1e-4), "mismatch (test 1)"

    # Test 2: multiple pair tiles + non-multiple-of-128 pair count + padded
    # batch (exercises padding / slicing / multi-tile grid paths).
    key2 = jax.random.PRNGKey(1)
    n_batch2, n_atom2 = 3, 24                        # -> n_pairs = 276
    x2 = jax.random.normal(key2, (n_batch2, n_atom2, 3), dtype=jnp.float32)
    out2 = jax.block_until_ready(distance_layer(x2))
    ref2 = _reference(x2)
    assert out2.shape == (n_batch2, n_atom2 * (n_atom2 - 1) // 2)
    assert jnp.allclose(out2, ref2, atol=1e-4, rtol=1e-4), "mismatch (test 2)"

    print("KERNEL_OK")
</pallas_src>

<mosaic_0001>
module attributes {stable_mosaic.version = 11 : i64} {
  func.func @_distance_kernel(%arg0: i32, %arg1: memref<2x128xi32, #tpu.memory_space<vmem>>, %arg2: memref<8x128xi32, #tpu.memory_space<vmem>>, %arg3: memref<24x8xf32, #tpu.memory_space<vmem>>, %arg4: memref<8x128xf32, #tpu.memory_space<vmem>>) attributes {dimension_semantics = [#tpu.dimension_semantics<parallel>], iteration_bounds = array<i64: 1>, scalar_prefetch = 0 : i64, scratch_operands = 0 : i64, tpu.core_type = #tpu.core_type<tc>, window_params = [{transform_indices = @transform_0, window_bounds = array<i64: 2, 128>}, {pipeline_mode = #tpu.pipeline_mode<synchronous>, transform_indices = @transform_1, window_bounds = array<i64: 8, 128>}, {pipeline_mode = #tpu.pipeline_mode<synchronous>, transform_indices = @transform_2, window_bounds = array<i64: 24, 8>}, {transform_indices = @transform_3, window_bounds = array<i64: 8, 128>}]} {
    %c0 = arith.constant 0 : index
    %c0_0 = arith.constant 0 : index
    %0 = vector.load %arg1[%c0, %c0_0] : memref<2x128xi32, #tpu.memory_space<vmem>>, vector<1x128xi32>
    %c1 = arith.constant 1 : index
    %c0_1 = arith.constant 0 : index
    %1 = vector.load %arg1[%c1, %c0_1] : memref<2x128xi32, #tpu.memory_space<vmem>>, vector<1x128xi32>
    %c0_2 = arith.constant 0 : index
    %c0_3 = arith.constant 0 : index
    %2 = vector.load %arg2[%c0_2, %c0_3] : memref<8x128xi32, #tpu.memory_space<vmem>>, vector<8x128xi32>
    %3 = vector.broadcast %1 : vector<1x128xi32> to vector<8x128xi32>
    %4 = arith.cmpi eq, %2, %3 : vector<8x128xi32>
    %5 = vector.broadcast %0 : vector<1x128xi32> to vector<8x128xi32>
    %6 = arith.cmpi eq, %2, %5 : vector<8x128xi32>
    %cst = arith.constant -1.000000e+00 : f32
    %cst_4 = arith.constant 0.000000e+00 : f32
    %7 = vector.broadcast %cst : f32 to vector<8x128xf32>
    %8 = vector.broadcast %cst_4 : f32 to vector<8x128xf32>
    %9 = arith.select %6, %7, %8 : vector<8x128xi1>, vector<8x128xf32>
    %cst_5 = arith.constant 1.000000e+00 : f32
    %10 = vector.broadcast %cst_5 : f32 to vector<8x128xf32>
    %11 = arith.select %4, %10, %9 : vector<8x128xi1>, vector<8x128xf32>
    %c0_6 = arith.constant 0 : index
    %c0_7 = arith.constant 0 : index
    %12 = vector.load %arg3[%c0_6, %c0_7] : memref<24x8xf32, #tpu.memory_space<vmem>>, vector<24x8xf32>
    %cst_8 = arith.constant dense<0.000000e+00> : vector<24x128xf32>
    %13 = tpu.matmul %12, %11, %cst_8 {dimension_numbers = #tpu.dot_dimension_numbers<[1], [0], [0], [1], [0, 0, 1, 1], [], []>, precision = #tpu.contract_precision<fp32>} : vector<24x8xf32>, vector<8x128xf32>, vector<24x128xf32> -> vector<24x128xf32>
    %14 = arith.mulf %13, %13 : vector<24x128xf32>
    %15 = vector.extract_strided_slice %14 {offsets = [0, 0], sizes = [8, 128], strides = [1, 1]} : vector<24x128xf32> to vector<8x128xf32>
    %16 = vector.extract_strided_slice %14 {offsets = [8, 0], sizes = [8, 128], strides = [1, 1]} : vector<24x128xf32> to vector<8x128xf32>
    %17 = arith.addf %15, %16 : vector<8x128xf32>
    %18 = vector.extract_strided_slice %14 {offsets = [16, 0], sizes = [8, 128], strides = [1, 1]} : vector<24x128xf32> to vector<8x128xf32>
    %19 = arith.addf %17, %18 : vector<8x128xf32>
    %20 = math.sqrt %19 : vector<8x128xf32>
    %c0_9 = arith.constant 0 : index
    %c0_10 = arith.constant 0 : index
    %21 = vector.load %arg4[%c0_9, %c0_10] : memref<8x128xf32, #tpu.memory_space<vmem>>, vector<8x128xf32>
    tpu.vector_store %arg4[%c0_9, %c0_10], %20 {strides = array<i32>} : memref<8x128xf32, #tpu.memory_space<vmem>>, vector<8x128xf32>,
    return
  }
  func.func @transform_0(%arg0: i32) -> (i32, i32) {
    %c0_i32 = arith.constant 0 : i32
    %c0_i32_0 = arith.constant 0 : i32
    return %c0_i32, %arg0 : i32, i32
  }
  func.func @transform_1(%arg0: i32) -> (i32, i32) {
    %c0_i32 = arith.constant 0 : i32
    %c0_i32_0 = arith.constant 0 : i32
    %c0_i32_1 = arith.constant 0 : i32
    return %c0_i32, %c0_i32_0 : i32, i32
  }
  func.func @transform_2(%arg0: i32) -> (i32, i32) {
    %c0_i32 = arith.constant 0 : i32
    %c0_i32_0 = arith.constant 0 : i32
    %c0_i32_1 = arith.constant 0 : i32
    return %c0_i32, %c0_i32_0 : i32, i32
  }
  func.func @transform_3(%arg0: i32) -> (i32, i32) {
    %c0_i32 = arith.constant 0 : i32
    %c0_i32_0 = arith.constant 0 : i32
    return %c0_i32, %arg0 : i32, i32
  }
}

</mosaic_0001>

<llo_original>
// kernel: tpu_custom_call.1
$region0: #{tpu_custom_call.1}
  #allocation0 [shape = 'u32[]', space=smem, size = 0x4, offset = 0x4, fixed_abs, tag = 'smem constant byte address 0x4 - core index']
  #allocation1 [shape = 'u32[144,128]{1,0:T(1,128)}', space=vmem, size = 0x12000, scoped, tag = 'internal scratch']
  %s0 = inlined_call_operand.vmem [shape: s32[2,128], index: 0, kind: input, shape index: {}]
  %s1 = inlined_call_operand.vmem [shape: s32[8,128], index: 1, kind: input, shape index: {}]
  %s2 = inlined_call_operand.vmem [shape: f32[24,8], index: 2, kind: input, shape index: {}]
  %s3 = inlined_call_operand.hbm [shape: f32[8,128], index: 3, kind: output, shape index: {}]
  %s4 = sld [smem:[#allocation0]]
  $region22: #{tpu_custom_call.1} parent=0
    _
  %s6 = ssub.s32 1, %s4
  %s7 = scalar_select 0, %s6, %s4
  $region1: #{tpu_custom_call.1} parent=0
    #allocation2 [shape = 'u8[4096]{0}', space=vmem, size = 0x1000, scoped, tag = 'output window, operand 0, single buffered']
    #allocation3 [shape = 's32[1]{0}', space=sflag, size = 0x4, scoped, tag = 'scoped memory for tpu_custom_call.1']
    %8 = vsyncpa [#allocation3], 0
    // Predicated region
    $region2: #{tpu_custom_call.1} parent=1 // pred_check
      _
    $region3: #{tpu_custom_call.1} parent=1 // pred_check_branch
      %10 = sbr.rel (0) target = $region5
    $region4: #{tpu_custom_call.1} parent=1 // pred_region
      _
    $region5: #{tpu_custom_call.1} parent=1 // pred_fallthru
      _
    // Predicated region
    $region6: #{tpu_custom_call.1} parent=1 // pred_check
      _
    $region7: #{tpu_custom_call.1} parent=1 // pred_check_branch
      %12 = sbr.rel (0) target = $region9
    $region8: #{tpu_custom_call.1} parent=1 // pred_region
      _
    $region9: #{tpu_custom_call.1} parent=1 // pred_fallthru
      _
    // Predicated region
    $region10: #{tpu_custom_call.1} parent=1 // pred_check
      _
    $region11: #{tpu_custom_call.1} parent=1 // pred_check_branch
      %14 = sbr.rel (0) target = $region13
    $region12: #{tpu_custom_call.1} parent=1 // pred_region
      _
    $region13: #{tpu_custom_call.1} parent=1 // pred_fallthru
      _
    %v15 = vld [vmem:[%s0] sm:$0x1]
    %v16 = vld [vmem:[%s0 + $0x1] sm:$0x1]
    %v17 = vld [vmem:[%s1] sm:$0xff]
    %v18 = vlaneseq
    %v19 = vshrl.u32 %v18, 7
    %v20 = vsub.s32 0, %v19
    %v21 = vrot.slane %v16, %v20
    %vm22 = vcmp.eq.s32.totalorder %v17, %v21
    %v23 = vlaneseq
    %v24 = vshrl.u32 %v23, 7
    %v25 = vsub.s32 0, %v24
    %v26 = vrot.slane %v15, %v25
    %vm27 = vcmp.eq.s32.totalorder %v17, %v26
    %v28 = vsel %vm27, -1.0, 0.0
    %v29 = vsel %vm22, 1.0, %v28
    %v30 = vld [vmem:[%s2] sm:$0xff]
    %v31 = vld [vmem:[%s2 + $0x8] sm:$0xff]
    %v32 = vld [vmem:[%s2 + $0x10] sm:$0xff]
    %vm33 = vcmask 64512
    %v35 = vsel %vm33, %v30, 0
    %v38 = vsel %vm33, %v31, 0
    %v41 = vsel %vm33, %v32, 0
    %43 = vmatprep.subr.mxu0 0.0
    %44 = vmatpush1.msra.mxu0 0.0
    %45 = vmatprep.subr.mxu0 0.0
    %46 = vmatpush1.msra.mxu0 0.0
    %47 = vmatprep.subr.mxu0 0.0
    %48 = vmatpush1.msra.mxu0 0.0
    %49 = vmatprep.subr.mxu0 0.0
    %50 = vmatpush1.msra.mxu0 0.0
    %51 = vmatprep.subr.mxu0 0.0
    %52 = vmatpush1.msra.mxu0 0.0
    %53 = vmatprep.subr.mxu0 0.0
    %54 = vmatpush1.msra.mxu0 0.0
    %55 = vmatprep.subr.mxu0 0.0
    %56 = vmatpush1.msra.mxu0 0.0
    %57 = vmatprep.subr.mxu0 0.0
    %58 = vmatpush1.msra.mxu0 0.0
    %59 = vmatprep.subr.mxu0 0.0
    %60 = vmatpush1.msra.mxu0 0.0
    %61 = vmatprep.subr.mxu0 0.0
    %62 = vmatpush1.msra.mxu0 0.0
    %63 = vmatprep.subr.mxu0 0.0
    %64 = vmatpush1.msra.mxu0 0.0
    %65 = vmatprep.subr.mxu0 0.0
    %66 = vmatpush1.msra.mxu0 0.0
    %67 = vmatprep.subr.mxu0 0.0
    %68 = vmatpush1.msra.mxu0 0.0
    %69 = vmatprep.subr.mxu0 0.0
    %70 = vmatpush1.msra.mxu0 0.0
    %71 = vmatprep.subr.mxu0 0.0
    %72 = vmatpush1.msra.mxu0 0.0
    %73 = vmatprep.subr.mxu0 0.0
    %74 = vmatpush1.msra.mxu0 %v29
    %75 = vmatprep.subr.mxu0 0.0
    %76 = vmatpush2.msra.mxu0 0.0
    %77 = vmatprep.subr.mxu0 0.0
    %78 = vmatpush2.msra.mxu0 0.0
    %79 = vmatprep.subr.mxu0 0.0
    %80 = vmatpush2.msra.mxu0 0.0
    %81 = vmatprep.subr.mxu0 0.0
    %82 = vmatpush2.msra.mxu0 0.0
    %83 = vmatprep.subr.mxu0 0.0
    %84 = vmatpush2.msra.mxu0 0.0
    %85 = vmatprep.subr.mxu0 0.0
    %86 = vmatpush2.msra.mxu0 0.0
    %87 = vmatprep.subr.mxu0 0.0
    %88 = vmatpush2.msra.mxu0 0.0
    %89 = vmatprep.subr.mxu0 0.0
    %90 = vmatpush2.msra.mxu0 0.0
    %91 = vmatprep.subr.mxu0 0.0
    %92 = vmatpush2.msra.mxu0 0.0
    %93 = vmatprep.subr.mxu0 0.0
    %94 = vmatpush2.msra.mxu0 0.0
    %95 = vmatprep.subr.mxu0 0.0
    %96 = vmatpush2.msra.mxu0 0.0
    %97 = vmatprep.subr.mxu0 0.0
    %98 = vmatpush2.msra.mxu0 0.0
    %99 = vmatprep.subr.mxu0 0.0
    %100 = vmatpush2.msra.mxu0 0.0
    %101 = vmatprep.subr.mxu0 0.0
    %102 = vmatpush2.msra.mxu0 0.0
    %103 = vmatprep.subr.mxu0 0.0
    %104 = vmatpush2.msra.mxu0 0.0
    %105 = vmatprep.subr.mxu0 0.0
    %106 = vmatpush2.msra.mxu0 0.0
    %107 = vmatprep.mubr.f32.mxu0 0.0
    %v108 = vand.u32 %v35, 4294901760
    %v109 = vsub.f32 %v35, %v108
    %v110 = vand.u32 %v109, 4294901760
    %v111 = vsub.f32 %v109, %v110
    %v112 = vand.u32 %v111, 4294901760
    %113 = vmatmul.mubr.f32.gmra.mxu0 %v112
    %v114 = vpop.f32.mrf.mxu0
    %v115 = vadd.f32 0.0, %v114
    %v116 = vpop.f32.mrf.mxu0
    %117 = vmatprep.mubr.f32.mxu0 0.0
    %v118 = vand.u32 %v38, 4294901760
    %v119 = vsub.f32 %v38, %v118
    %v120 = vand.u32 %v119, 4294901760
    %v121 = vsub.f32 %v119, %v120
    %v122 = vand.u32 %v121, 4294901760
    %123 = vmatmul.mubr.f32.gmra.mxu0 %v122
    %v124 = vpop.f32.mrf.mxu0
    %v125 = vadd.f32 0.0, %v124
    %v126 = vpop.f32.mrf.mxu0
    %127 = vmatprep.mubr.f32.mxu0 0.0
    %v128 = vand.u32 %v41, 4294901760
    %v129 = vsub.f32 %v41, %v128
    %v130 = vand.u32 %v129, 4294901760
    %v131 = vsub.f32 %v129, %v130
    %v132 = vand.u32 %v131, 4294901760
    %133 = vmatmul.mubr.f32.gmra.mxu0 %v132
    %v134 = vpop.f32.mrf.mxu0
    %v135 = vadd.f32 0.0, %v134
    %v136 = vpop.f32.mrf.mxu0
    %137 = vdwg.mxu0
    %138 = vmatprep.subr.mxu0 0.0
    %139 = vmatpush1.msra.mxu0 0.0
    %140 = vmatprep.subr.mxu0 0.0
    %141 = vmatpush1.msra.mxu0 0.0
    %142 = vmatprep.subr.mxu0 0.0
    %143 = vmatpush1.msra.mxu0 0.0
    %144 = vmatprep.subr.mxu0 0.0
    %145 = vmatpush1.msra.mxu0 0.0
    %146 = vmatprep.subr.mxu0 0.0
    %147 = vmatpush1.msra.mxu0 0.0
    %148 = vmatprep.subr.mxu0 0.0
    %149 = vmatpush1.msra.mxu0 0.0
    %150 = vmatprep.subr.mxu0 0.0
    %151 = vmatpush1.msra.mxu0 0.0
    %152 = vmatprep.subr.mxu0 0.0
    %153 = vmatpush1.msra.mxu0 0.0
    %154 = vmatprep.subr.mxu0 0.0
    %155 = vmatpush1.msra.mxu0 0.0
    %156 = vmatprep.subr.mxu0 0.0
    %157 = vmatpush1.msra.mxu0 0.0
    %158 = vmatprep.subr.mxu0 0.0
    %159 = vmatpush1.msra.mxu0 0.0
    %160 = vmatprep.subr.mxu0 0.0
    %161 = vmatpush1.msra.mxu0 0.0
    %162 = vmatprep.subr.mxu0 0.0
    %163 = vmatpush1.msra.mxu0 0.0
    %164 = vmatprep.subr.mxu0 0.0
    %165 = vmatpush1.msra.mxu0 0.0
    %166 = vmatprep.subr.mxu0 0.0
    %167 = vmatpush1.msra.mxu0 0.0
    %168 = vmatprep.subr.mxu0 0.0
    %v169 = vsub.f32 %v29, %v29
    %v170 = vand.u32 %v169, 4294901760
    %v171 = vsub.f32 %v169, %v170
    %v172 = vand.u32 %v171, 4294901760
    %173 = vmatpush1.msra.mxu0 %v172
    %174 = vmatprep.subr.mxu0 0.0
    %175 = vmatpush2.msra.mxu0 0.0
    %176 = vmatprep.subr.mxu0 0.0
    %177 = vmatpush2.msra.mxu0 0.0
    %178 = vmatprep.subr.mxu0 0.0
    %179 = vmatpush2.msra.mxu0 0.0
    %180 = vmatprep.subr.mxu0 0.0
    %181 = vmatpush2.msra.mxu0 0.0
    %182 = vmatprep.subr.mxu0 0.0
    %183 = vmatpush2.msra.mxu0 0.0
    %184 = vmatprep.subr.mxu0 0.0
    %185 = vmatpush2.msra.mxu0 0.0
    %186 = vmatprep.subr.mxu0 0.0
    %187 = vmatpush2.msra.mxu0 0.0
    %188 = vmatprep.subr.mxu0 0.0
    %189 = vmatpush2.msra.mxu0 0.0
    %190 = vmatprep.subr.mxu0 0.0
    %191 = vmatpush2.msra.mxu0 0.0
    %192 = vmatprep.subr.mxu0 0.0
    %193 = vmatpush2.msra.mxu0 0.0
    %194 = vmatprep.subr.mxu0 0.0
    %195 = vmatpush2.msra.mxu0 0.0
    %196 = vmatprep.subr.mxu0 0.0
    %197 = vmatpush2.msra.mxu0 0.0
    %198 = vmatprep.subr.mxu0 0.0
    %199 = vmatpush2.msra.mxu0 0.0
    %200 = vmatprep.subr.mxu0 0.0
    %201 = vmatpush2.msra.mxu0 0.0
    %202 = vmatprep.subr.mxu0 0.0
    %203 = vmatpush2.msra.mxu0 0.0
    %204 = vmatprep.subr.mxu0 0.0
    %205 = vmatpush2.msra.mxu0 0.0
    %206 = vmatprep.mubr.f32.mxu0 0.0
    %v207 = vand.u32 %v35, 4294901760
    %208 = vmatmul.mubr.f32.gmra.mxu0 %v207
    %v209 = vpop.f32.mrf.mxu0
    %v210 = vadd.f32 %v115, %v209
    %v211 = vpop.f32.mrf.mxu0
    %212 = vmatprep.mubr.f32.mxu0 0.0
    %v213 = vand.u32 %v38, 4294901760
    %214 = vmatmul.mubr.f32.gmra.mxu0 %v213
    %v215 = vpop.f32.mrf.mxu0
    %v216 = vadd.f32 %v125, %v215
    %v217 = vpop.f32.mrf.mxu0
    %218 = vmatprep.mubr.f32.mxu0 0.0
    %v219 = vand.u32 %v41, 4294901760
    %220 = vmatmul.mubr.f32.gmra.mxu0 %v219
    %v221 = vpop.f32.mrf.mxu0
    %v222 = vadd.f32 %v135, %v221
    %v223 = vpop.f32.mrf.mxu0
    %224 = vdwg.mxu0
    %225 = vmatprep.subr.mxu0 0.0
    %226 = vmatpush1.msra.mxu0 0.0
    %227 = vmatprep.subr.mxu0 0.0
    %228 = vmatpush1.msra.mxu0 0.0
    %229 = vmatprep.subr.mxu0 0.0
    %230 = vmatpush1.msra.mxu0 0.0
    %231 = vmatprep.subr.mxu0 0.0
    %232 = vmatpush1.msra.mxu0 0.0
    %233 = vmatprep.subr.mxu0 0.0
    %234 = vmatpush1.msra.mxu0 0.0
    %235 = vmatprep.subr.mxu0 0.0
    %236 = vmatpush1.msra.mxu0 0.0
    %237 = vmatprep.subr.mxu0 0.0
    %238 = vmatpush1.msra.mxu0 0.0
    %239 = vmatprep.subr.mxu0 0.0
    %240 = vmatpush1.msra.mxu0 0.0
    %241 = vmatprep.subr.mxu0 0.0
    %242 = vmatpush1.msra.mxu0 0.0
    %243 = vmatprep.subr.mxu0 0.0
    %244 = vmatpush1.msra.mxu0 0.0
    %245 = vmatprep.subr.mxu0 0.0
    %246 = vmatpush1.msra.mxu0 0.0
    %247 = vmatprep.subr.mxu0 0.0
    %248 = vmatpush1.msra.mxu0 0.0
    %249 = vmatprep.subr.mxu0 0.0
    %250 = vmatpush1.msra.mxu0 0.0
    %251 = vmatprep.subr.mxu0 0.0
    %252 = vmatpush1.msra.mxu0 0.0
    %253 = vmatprep.subr.mxu0 0.0
    %254 = vmatpush1.msra.mxu0 0.0
    %255 = vmatprep.subr.mxu0 0.0
    %v256 = vsub.f32 %v29, %v29
    %257 = vmatpush1.msra.mxu0 %v256
    %258 = vmatprep.subr.mxu0 0.0
    %259 = vmatpush2.msra.mxu0 0.0
    %260 = vmatprep.subr.mxu0 0.0
    %261 = vmatpush2.msra.mxu0 0.0
    %262 = vmatprep.subr.mxu0 0.0
    %263 = vmatpush2.msra.mxu0 0.0
    %264 = vmatprep.subr.mxu0 0.0
    %265 = vmatpush2.msra.mxu0 0.0
    %266 = vmatprep.subr.mxu0 0.0
    %267 = vmatpush2.msra.mxu0 0.0
    %268 = vmatprep.subr.mxu0 0.0
    %269 = vmatpush2.msra.mxu0 0.0
    %270 = vmatprep.subr.mxu0 0.0
    %271 = vmatpush2.msra.mxu0 0.0
    %272 = vmatprep.subr.mxu0 0.0
    %273 = vmatpush2.msra.mxu0 0.0
    %274 = vmatprep.subr.mxu0 0.0
    %275 = vmatpush2.msra.mxu0 0.0
    %276 = vmatprep.subr.mxu0 0.0
    %277 = vmatpush2.msra.mxu0 0.0
    %278 = vmatprep.subr.mxu0 0.0
    %279 = vmatpush2.msra.mxu0 0.0
    %280 = vmatprep.subr.mxu0 0.0
    %281 = vmatpush2.msra.mxu0 0.0
    %282 = vmatprep.subr.mxu0 0.0
    %283 = vmatpush2.msra.mxu0 0.0
    %284 = vmatprep.subr.mxu0 0.0
    %285 = vmatpush2.msra.mxu0 0.0
    %286 = vmatprep.subr.mxu0 0.0
    %287 = vmatpush2.msra.mxu0 0.0
    %288 = vmatprep.subr.mxu0 0.0
    %289 = vmatpush2.msra.mxu0 0.0
    %290 = vmatprep.mubr.f32.mxu0 0.0
    %v291 = vand.u32 %v35, 4294901760
    %v292 = vsub.f32 %v35, %v291
    %293 = vmatmul.mubr.f32.gmra.mxu0 %v292
    %v294 = vpop.f32.mrf.mxu0
    %v295 = vadd.f32 %v210, %v294
    %v296 = vpop.f32.mrf.mxu0
    %297 = vmatprep.mubr.f32.mxu0 0.0
    %v298 = vand.u32 %v38, 4294901760
    %v299 = vsub.f32 %v38, %v298
    %300 = vmatmul.mubr.f32.gmra.mxu0 %v299
    %v301 = vpop.f32.mrf.mxu0
    %v302 = vadd.f32 %v216, %v301
    %v303 = vpop.f32.mrf.mxu0
    %304 = vmatprep.mubr.f32.mxu0 0.0
    %v305 = vand.u32 %v41, 4294901760
    %v306 = vsub.f32 %v41, %v305
    %307 = vmatmul.mubr.f32.gmra.mxu0 %v306
    %v308 = vpop.f32.mrf.mxu0
    %v309 = vadd.f32 %v222, %v308
    %v310 = vpop.f32.mrf.mxu0
    %311 = vdwg.mxu0
    %312 = vmatprep.subr.mxu0 0.0
    %313 = vmatpush1.msra.mxu0 0.0
    %314 = vmatprep.subr.mxu0 0.0
    %315 = vmatpush1.msra.mxu0 0.0
    %316 = vmatprep.subr.mxu0 0.0
    %317 = vmatpush1.msra.mxu0 0.0
    %318 = vmatprep.subr.mxu0 0.0
    %319 = vmatpush1.msra.mxu0 0.0
    %320 = vmatprep.subr.mxu0 0.0
    %321 = vmatpush1.msra.mxu0 0.0
    %322 = vmatprep.subr.mxu0 0.0
    %323 = vmatpush1.msra.mxu0 0.0
    %324 = vmatprep.subr.mxu0 0.0
    %325 = vmatpush1.msra.mxu0 0.0
    %326 = vmatprep.subr.mxu0 0.0
    %327 = vmatpush1.msra.mxu0 0.0
    %328 = vmatprep.subr.mxu0 0.0
    %329 = vmatpush1.msra.mxu0 0.0
    %330 = vmatprep.subr.mxu0 0.0
    %331 = vmatpush1.msra.mxu0 0.0
    %332 = vmatprep.subr.mxu0 0.0
    %333 = vmatpush1.msra.mxu0 0.0
    %334 = vmatprep.subr.mxu0 0.0
    %335 = vmatpush1.msra.mxu0 0.0
    %336 = vmatprep.subr.mxu0 0.0
    %337 = vmatpush1.msra.mxu0 0.0
    %338 = vmatprep.subr.mxu0 0.0
    %339 = vmatpush1.msra.mxu0 0.0
    %340 = vmatprep.subr.mxu0 0.0
    %341 = vmatpush1.msra.mxu0 0.0
    %342 = vmatprep.subr.mxu0 0.0
    %343 = vmatpush1.msra.mxu0 %v29
    %344 = vmatprep.subr.mxu0 0.0
    %345 = vmatpush2.msra.mxu0 0.0
    %346 = vmatprep.subr.mxu0 0.0
    %347 = vmatpush2.msra.mxu0 0.0
    %348 = vmatprep.subr.mxu0 0.0
    %349 = vmatpush2.msra.mxu0 0.0
    %350 = vmatprep.subr.mxu0 0.0
    %351 = vmatpush2.msra.mxu0 0.0
    %352 = vmatprep.subr.mxu0 0.0
    %353 = vmatpush2.msra.mxu0 0.0
    %354 = vmatprep.subr.mxu0 0.0
    %355 = vmatpush2.msra.mxu0 0.0
    %356 = vmatprep.subr.mxu0 0.0
    %357 = vmatpush2.msra.mxu0 0.0
    %358 = vmatprep.subr.mxu0 0.0
    %359 = vmatpush2.msra.mxu0 0.0
    %360 = vmatprep.subr.mxu0 0.0
    %361 = vmatpush2.msra.mxu0 0.0
    %362 = vmatprep.subr.mxu0 0.0
    %363 = vmatpush2.msra.mxu0 0.0
    %364 = vmatprep.subr.mxu0 0.0
    %365 = vmatpush2.msra.mxu0 0.0
    %366 = vmatprep.subr.mxu0 0.0
    %367 = vmatpush2.msra.mxu0 0.0
    %368 = vmatprep.subr.mxu0 0.0
    %369 = vmatpush2.msra.mxu0 0.0
    %370 = vmatprep.subr.mxu0 0.0
    %371 = vmatpush2.msra.mxu0 0.0
    %372 = vmatprep.subr.mxu0 0.0
    %373 = vmatpush2.msra.mxu0 0.0
    %374 = vmatprep.subr.mxu0 0.0
    %375 = vmatpush2.msra.mxu0 0.0
    %376 = vmatprep.mubr.f32.mxu0 0.0
    %v377 = vand.u32 %v35, 4294901760
    %v378 = vsub.f32 %v35, %v377
    %v379 = vand.u32 %v378, 4294901760
    %380 = vmatmul.mubr.f32.gmra.mxu0 %v379
    %v381 = vpop.f32.mrf.mxu0
    %v382 = vadd.f32 %v295, %v381
    %v383 = vpop.f32.mrf.mxu0
    %384 = vmatprep.mubr.f32.mxu0 0.0
    %v385 = vand.u32 %v38, 4294901760
    %v386 = vsub.f32 %v38, %v385
    %v387 = vand.u32 %v386, 4294901760
    %388 = vmatmul.mubr.f32.gmra.mxu0 %v387
    %v389 = vpop.f32.mrf.mxu0
    %v390 = vadd.f32 %v302, %v389
    %v391 = vpop.f32.mrf.mxu0
    %392 = vmatprep.mubr.f32.mxu0 0.0
    %v393 = vand.u32 %v41, 4294901760
    %v394 = vsub.f32 %v41, %v393
    %v395 = vand.u32 %v394, 4294901760
    %396 = vmatmul.mubr.f32.gmra.mxu0 %v395
    %v397 = vpop.f32.mrf.mxu0
    %v398 = vadd.f32 %v309, %v397
    %v399 = vpop.f32.mrf.mxu0
    %400 = vdwg.mxu0
    %401 = vmatprep.subr.mxu0 0.0
    %402 = vmatpush1.msra.mxu0 0.0
    %403 = vmatprep.subr.mxu0 0.0
    %404 = vmatpush1.msra.mxu0 0.0
    %405 = vmatprep.subr.mxu0 0.0
    %406 = vmatpush1.msra.mxu0 0.0
    %407 = vmatprep.subr.mxu0 0.0
    %408 = vmatpush1.msra.mxu0 0.0
    %409 = vmatprep.subr.mxu0 0.0
    %410 = vmatpush1.msra.mxu0 0.0
    %411 = vmatprep.subr.mxu0 0.0
    %412 = vmatpush1.msra.mxu0 0.0
    %413 = vmatprep.subr.mxu0 0.0
    %414 = vmatpush1.msra.mxu0 0.0
    %415 = vmatprep.subr.mxu0 0.0
    %416 = vmatpush1.msra.mxu0 0.0
    %417 = vmatprep.subr.mxu0 0.0
    %418 = vmatpush1.msra.mxu0 0.0
    %419 = vmatprep.subr.mxu0 0.0
    %420 = vmatpush1.msra.mxu0 0.0
    %421 = vmatprep.subr.mxu0 0.0
    %422 = vmatpush1.msra.mxu0 0.0
    %423 = vmatprep.subr.mxu0 0.0
    %424 = vmatpush1.msra.mxu0 0.0
    %425 = vmatprep.subr.mxu0 0.0
    %426 = vmatpush1.msra.mxu0 0.0
    %427 = vmatprep.subr.mxu0 0.0
    %428 = vmatpush1.msra.mxu0 0.0
    %429 = vmatprep.subr.mxu0 0.0
    %430 = vmatpush1.msra.mxu0 0.0
    %431 = vmatprep.subr.mxu0 0.0
    %v432 = vsub.f32 %v29, %v29
    %v433 = vand.u32 %v432, 4294901760
    %434 = vmatpush1.msra.mxu0 %v433
    %435 = vmatprep.subr.mxu0 0.0
    %436 = vmatpush2.msra.mxu0 0.0
    %437 = vmatprep.subr.mxu0 0.0
    %438 = vmatpush2.msra.mxu0 0.0
    %439 = vmatprep.subr.mxu0 0.0
    %440 = vmatpush2.msra.mxu0 0.0
    %441 = vmatprep.subr.mxu0 0.0
    %442 = vmatpush2.msra.mxu0 0.0
    %443 = vmatprep.subr.mxu0 0.0
    %444 = vmatpush2.msra.mxu0 0.0
    %445 = vmatprep.subr.mxu0 0.0
    %446 = vmatpush2.msra.mxu0 0.0
    %447 = vmatprep.subr.mxu0 0.0
    %448 = vmatpush2.msra.mxu0 0.0
    %449 = vmatprep.subr.mxu0 0.0
    %450 = vmatpush2.msra.mxu0 0.0
    %451 = vmatprep.subr.mxu0 0.0
    %452 = vmatpush2.msra.mxu0 0.0
    %453 = vmatprep.subr.mxu0 0.0
    %454 = vmatpush2.msra.mxu0 0.0
    %455 = vmatprep.subr.mxu0 0.0
    %456 = vmatpush2.msra.mxu0 0.0
    %457 = vmatprep.subr.mxu0 0.0
    %458 = vmatpush2.msra.mxu0 0.0
    %459 = vmatprep.subr.mxu0 0.0
    %460 = vmatpush2.msra.mxu0 0.0
    %461 = vmatprep.subr.mxu0 0.0
    %462 = vmatpush2.msra.mxu0 0.0
    %463 = vmatprep.subr.mxu0 0.0
    %464 = vmatpush2.msra.mxu0 0.0
    %465 = vmatprep.subr.mxu0 0.0
    %466 = vmatpush2.msra.mxu0 0.0
    %467 = vmatprep.mubr.f32.mxu0 0.0
    %v468 = vand.u32 %v35, 4294901760
    %469 = vmatmul.mubr.f32.gmra.mxu0 %v468
    %v470 = vpop.f32.mrf.mxu0
    %v471 = vadd.f32 %v382, %v470
    %v472 = vpop.f32.mrf.mxu0
    %473 = vmatprep.mubr.f32.mxu0 0.0
    %v474 = vand.u32 %v38, 4294901760
    %475 = vmatmul.mubr.f32.gmra.mxu0 %v474
    %v476 = vpop.f32.mrf.mxu0
    %v477 = vadd.f32 %v390, %v476
    %v478 = vpop.f32.mrf.mxu0
    %479 = vmatprep.mubr.f32.mxu0 0.0
    %v480 = vand.u32 %v41, 4294901760
    %481 = vmatmul.mubr.f32.gmra.mxu0 %v480
    %v482 = vpop.f32.mrf.mxu0
    %v483 = vadd.f32 %v398, %v482
    %v484 = vpop.f32.mrf.mxu0
    %485 = vdwg.mxu0
    %486 = vmatprep.subr.mxu0 0.0
    %487 = vmatpush1.msra.mxu0 0.0
    %488 = vmatprep.subr.mxu0 0.0
    %489 = vmatpush1.msra.mxu0 0.0
    %490 = vmatprep.subr.mxu0 0.0
    %491 = vmatpush1.msra.mxu0 0.0
    %492 = vmatprep.subr.mxu0 0.0
    %493 = vmatpush1.msra.mxu0 0.0
    %494 = vmatprep.subr.mxu0 0.0
    %495 = vmatpush1.msra.mxu0 0.0
    %496 = vmatprep.subr.mxu0 0.0
    %497 = vmatpush1.msra.mxu0 0.0
    %498 = vmatprep.subr.mxu0 0.0
    %499 = vmatpush1.msra.mxu0 0.0
    %500 = vmatprep.subr.mxu0 0.0
    %501 = vmatpush1.msra.mxu0 0.0
    %502 = vmatprep.subr.mxu0 0.0
    %503 = vmatpush1.msra.mxu0 0.0
    %504 = vmatprep.subr.mxu0 0.0
    %505 = vmatpush1.msra.mxu0 0.0
    %506 = vmatprep.subr.mxu0 0.0
    %507 = vmatpush1.msra.mxu0 0.0
    %508 = vmatprep.subr.mxu0 0.0
    %509 = vmatpush1.msra.mxu0 0.0
    %510 = vmatprep.subr.mxu0 0.0
    %511 = vmatpush1.msra.mxu0 0.0
    %512 = vmatprep.subr.mxu0 0.0
    %513 = vmatpush1.msra.mxu0 0.0
    %514 = vmatprep.subr.mxu0 0.0
    %515 = vmatpush1.msra.mxu0 0.0
    %516 = vmatprep.subr.mxu0 0.0
    %517 = vmatpush1.msra.mxu0 %v29
    %518 = vmatprep.subr.mxu0 0.0
    %519 = vmatpush2.msra.mxu0 0.0
    %520 = vmatprep.subr.mxu0 0.0
    %521 = vmatpush2.msra.mxu0 0.0
    %522 = vmatprep.subr.mxu0 0.0
    %523 = vmatpush2.msra.mxu0 0.0
    %524 = vmatprep.subr.mxu0 0.0
    %525 = vmatpush2.msra.mxu0 0.0
    %526 = vmatprep.subr.mxu0 0.0
    %527 = vmatpush2.msra.mxu0 0.0
    %528 = vmatprep.subr.mxu0 0.0
    %529 = vmatpush2.msra.mxu0 0.0
    %530 = vmatprep.subr.mxu0 0.0
    %531 = vmatpush2.msra.mxu0 0.0
    %532 = vmatprep.subr.mxu0 0.0
    %533 = vmatpush2.msra.mxu0 0.0
    %534 = vmatprep.subr.mxu0 0.0
    %535 = vmatpush2.msra.mxu0 0.0
    %536 = vmatprep.subr.mxu0 0.0
    %537 = vmatpush2.msra.mxu0 0.0
    %538 = vmatprep.subr.mxu0 0.0
    %539 = vmatpush2.msra.mxu0 0.0
    %540 = vmatprep.subr.mxu0 0.0
    %541 = vmatpush2.msra.mxu0 0.0
    %542 = vmatprep.subr.mxu0 0.0
    %543 = vmatpush2.msra.mxu0 0.0
    %544 = vmatprep.subr.mxu0 0.0
    %545 = vmatpush2.msra.mxu0 0.0
    %546 = vmatprep.subr.mxu0 0.0
    %547 = vmatpush2.msra.mxu0 0.0
    %548 = vmatprep.subr.mxu0 0.0
    %549 = vmatpush2.msra.mxu0 0.0
    %550 = vmatprep.mubr.f32.mxu0 0.0
    %v551 = vand.u32 %v35, 4294901760
    %552 = vmatmul.mubr.f32.gmra.mxu0 %v551
    %v553 = vpop.f32.mrf.mxu0
    %v554 = vadd.f32 %v471, %v553
    %v555 = vpop.f32.mrf.mxu0
    %556 = vmatprep.mubr.f32.mxu0 0.0
    %v557 = vand.u32 %v38, 4294901760
    %558 = vmatmul.mubr.f32.gmra.mxu0 %v557
    %v559 = vpop.f32.mrf.mxu0
    %v560 = vadd.f32 %v477, %v559
    %v561 = vpop.f32.mrf.mxu0
    %562 = vmatprep.mubr.f32.mxu0 0.0
    %v563 = vand.u32 %v41, 4294901760
    %564 = vmatmul.mubr.f32.gmra.mxu0 %v563
    %v565 = vpop.f32.mrf.mxu0
    %v566 = vadd.f32 %v483, %v565
    %v567 = vpop.f32.mrf.mxu0
    %568 = vdwg.mxu0
    %v569 = vmul.f32 %v554, %v554
    %v570 = vmul.f32 %v560, %v560
    %v571 = vmul.f32 %v566, %v566
    %v572 = vadd.f32 %v569, %v570
    %v573 = vadd.f32 %v572, %v571
    %v574 = vrsqrt.pop %v573
    %v575 = vmul.f32 %v573, %v574
    %vm576 = vcmp.eq.f32.partialorder %v573, inf
    %v577 = vsel %vm576, %v573, %v575
    %vm578 = vcmp.eq.f32.partialorder %v573, 0.0
    %v579 = vand.u32 %v573, 2147483648
    %v580 = vsel %vm578, %v579, %v577
    %581 = vst [vmem:[#allocation2] sm:$0xff] %v580
    // Predicated region
    $region14: #{tpu_custom_call.1} parent=1 // pred_check
      _
    $region15: #{tpu_custom_call.1} parent=1 // pred_check_branch
      %583 = sbr.rel (0) target = $region17
    $region16: #{tpu_custom_call.1} parent=1 // pred_region
      %s585 = ssub.s32 128, 128
      %586 = vsyncadd [#allocation3], %s585
      %s588 = sshll.u32 [#allocation2], 4
      %s589 = int_to_ptr.vmem [resolvable:$true] %s588
      %591 = dma.vmem_to_hbm [thread:$0]  %s589, 128, %s3, [#allocation3]
    $region17: #{tpu_custom_call.1} parent=1 // pred_fallthru
      _
    // Predicated region
    $region18: #{tpu_custom_call.1} parent=1 // pred_check
      _
    $region19: #{tpu_custom_call.1} parent=1 // pred_check_branch
      %593 = sbr.rel (0) target = $region21
    $region20: #{tpu_custom_call.1} parent=1 // pred_region
      %594 = dma.done [#allocation3], 128
    $region21: #{tpu_custom_call.1} parent=1 // pred_fallthru
      _
    %595 = vsyncpa [#allocation3], 1

</llo_original>
